<compile_context>
chip_gen: v7x
topology: tpu7x:2x2x1
jax: 0.10.0
libtpu: 0.0.40
codegen_flags: <defaults>
</compile_context>

<pallas_src>
import functools

import jax
import jax.numpy as jnp
from jax.experimental import pallas as pl
from jax.experimental.pallas import tpu as pltpu


def _round_up(x, m):
    return ((x + m - 1) // m) * m


def _matcher_kernel(s_ref, t_ref, wa_ref, wb_ref, prm_ref, out_ref, acc_ref,
                    *, hidden, n_valid, tile_n, tiles_per_part):
    # s_ref, t_ref : [tile_n, H] src / tgt token tiles
    # wa_ref, wb_ref: [H, H] transposed halves of the Linear(2H->H) weight
    # prm_ref      : [3, H] fused (bias, gamma, beta)
    # out_ref      : [1, 1, 128] per-part partial sum of cos (lane-dense block)
    # acc_ref      : VMEM [tile_n, 1] running per-row cos accumulator (this part)
    p = pl.program_id(0)            # parallel partial-sum axis (v7x: one per TC)
    i = pl.program_id(1)            # reduction over token tiles within the part

    @pl.when(i == 0)
    def _init():
        acc_ref[...] = jnp.zeros_like(acc_ref)

    s = s_ref[...]                  # [tile_n, H] f32
    t = t_ref[...]                  # [tile_n, H] f32
    prm = prm_ref[...]              # [3, H]
    bias = prm[0:1, :]
    gamma = prm[1:2, :]
    beta = prm[2:3, :]

    # Linear(2H -> H) as a split matmul: no [N, 2H] concat is ever materialized.
    z = jnp.dot(s, wa_ref[...], preferred_element_type=jnp.float32)
    z = z + jnp.dot(t, wb_ref[...], preferred_element_type=jnp.float32)
    a = jnp.maximum(z + bias, 0.0)  # ReLU

    # LayerNorm over hidden axis, single-pass stats (biased var, eps=1e-5).
    inv_h = 1.0 / hidden
    mean = jnp.sum(a, axis=-1, keepdims=True) * inv_h
    ex2 = jnp.sum(a * a, axis=-1, keepdims=True) * inv_h
    var = ex2 - mean * mean
    ln = (a - mean) * jax.lax.rsqrt(var + 1e-5) * gamma + beta

    # Cosine similarity with src (torch formula: dot / max(|ln|*|s|, 1e-8)),
    # single EUP rsqrt:  max(|ln|*|s|, eps) == sqrt(max(n2ln*n2s, eps^2)).
    dotp = jnp.sum(ln * s, axis=-1, keepdims=True)
    n2_ln = jnp.sum(ln * ln, axis=-1, keepdims=True)
    n2_s = jnp.sum(s * s, axis=-1, keepdims=True)
    cos = dotp * jax.lax.rsqrt(jnp.maximum(n2_ln * n2_s, 1e-16))

    # Mask rows past the true token count (zero-padded tail).
    tile_idx = p * tiles_per_part + i
    row = jax.lax.broadcasted_iota(jnp.int32, (tile_n, 1), 0) + tile_idx * tile_n
    cos = jnp.where(row < n_valid, cos, 0.0)

    acc_ref[...] += cos             # cheap per-tile VPU add; no per-tile reduce

    @pl.when(i == pl.num_programs(1) - 1)
    def _finalize():
        part_sum = jnp.sum(acc_ref[...])     # one XLU reduce per part
        out_ref[...] = jnp.broadcast_to(part_sum, out_ref.shape)


def pronunciation_matcher(src_phon, tgt_phon, w, b, gamma, beta, *,
                          tile_n=512, num_parts=2):
    """src_phon, tgt_phon: [B, S, H].  w: [H, 2H] (torch Linear layout), b/gamma/beta: [H]."""
    B, S, H = src_phon.shape
    N = B * S
    s2 = src_phon.reshape(N, H).astype(jnp.float32)
    t2 = tgt_phon.reshape(N, H).astype(jnp.float32)

    w = jnp.asarray(w, jnp.float32)          # [H, 2H]
    wa = w[:, :H].T                          # [H, H]   acts on src
    wb = w[:, H:].T                          # [H, H]   acts on tgt
    prm = jnp.stack([jnp.asarray(b, jnp.float32),
                     jnp.asarray(gamma, jnp.float32),
                     jnp.asarray(beta, jnp.float32)], axis=0)  # [3, H]

    # Tile sizing: 2 streamed inputs x 2 pipeline buffers x tile_n x H x 4B,
    # capped at ~8 MiB so it sits comfortably under v7x's 64 MiB VMEM.
    vmem_cap_rows = max(8, ((8 * 1024 * 1024) // (16 * H)) // 8 * 8)
    tile_n = min(tile_n, vmem_cap_rows)
    tile_n = min(tile_n, _round_up(pl.cdiv(N, num_parts), 8))
    tile_n = max(8, _round_up(tile_n, 8))
    tiles_per_part = max(1, pl.cdiv(N, tile_n * num_parts))
    n_pad = num_parts * tiles_per_part * tile_n

    if n_pad != N:
        pad = n_pad - N
        s2 = jnp.pad(s2, ((0, pad), (0, 0)))
        t2 = jnp.pad(t2, ((0, pad), (0, 0)))

    kernel = functools.partial(_matcher_kernel, hidden=H, n_valid=N,
                               tile_n=tile_n, tiles_per_part=tiles_per_part)

    partial_sums = pl.pallas_call(
        kernel,
        out_shape=jax.ShapeDtypeStruct((num_parts, 1, 128), jnp.float32),
        grid_spec=pltpu.PrefetchScalarGridSpec(
            num_scalar_prefetch=0,
            grid=(num_parts, tiles_per_part),
            in_specs=[
                pl.BlockSpec((tile_n, H), lambda p, i: (p * tiles_per_part + i, 0)),  # src
                pl.BlockSpec((tile_n, H), lambda p, i: (p * tiles_per_part + i, 0)),  # tgt
                pl.BlockSpec((H, H), lambda p, i: (0, 0)),                            # W_a
                pl.BlockSpec((H, H), lambda p, i: (0, 0)),                            # W_b
                pl.BlockSpec((3, H), lambda p, i: (0, 0)),                            # b/gamma/beta
            ],
            out_specs=pl.BlockSpec((1, 1, 128), lambda p, i: (p, 0, 0)),
            scratch_shapes=[pltpu.VMEM((tile_n, 1), jnp.float32)],
        ),
        compiler_params=pltpu.CompilerParams(
            dimension_semantics=("parallel", "arbitrary")),
    )(s2, t2, wa, wb, prm)

    return jnp.sum(partial_sums[:, 0, 0]) / jnp.float32(N)


if __name__ == "__main__":
    # Small shapes consistent with the module's forward: batch=2, seq=8, hidden=32
    B, S, H = 2, 8, 32

    key = jax.random.PRNGKey(0)
    k_src, k_tgt, k_w, k_b = jax.random.split(key, 4)

    src_phon = jax.random.normal(k_src, (B, S, H), dtype=jnp.float32)
    tgt_phon = jax.random.normal(k_tgt, (B, S, H), dtype=jnp.float32)

    # Deterministic parameter init (torch Linear-style uniform bounds);
    # LayerNorm: gamma = 1, beta = 0.
    bound = 1.0 / (2.0 * H) ** 0.5
    w = jax.random.uniform(k_w, (H, 2 * H), jnp.float32, -bound, bound)
    b = jax.random.uniform(k_b, (H,), jnp.float32, -bound, bound)
    gamma = jnp.ones((H,), jnp.float32)
    beta = jnp.zeros((H,), jnp.float32)

    result = pronunciation_matcher(src_phon, tgt_phon, w, b, gamma, beta)
    jax.block_until_ready(result)

    # Torch-faithful pure-JAX reference.
    s2 = src_phon.reshape(-1, H)
    t2 = tgt_phon.reshape(-1, H)
    z = jnp.concatenate([s2, t2], -1) @ w.T + b
    a = jnp.maximum(z, 0.0)
    mu = a.mean(-1, keepdims=True)
    var = ((a - mu) ** 2).mean(-1, keepdims=True)
    ln = (a - mu) / jnp.sqrt(var + 1e-5) * gamma + beta
    cos = (ln * s2).sum(-1) / jnp.maximum(
        jnp.linalg.norm(ln, axis=-1) * jnp.linalg.norm(s2, axis=-1), 1e-8
    )
    ref = cos.mean()
    assert jnp.allclose(result, ref, atol=5e-5, rtol=5e-5), (result, ref)

    print("KERNEL_OK")
</pallas_src>

<mosaic_0001>
module attributes {stable_mosaic.version = 11 : i64} {
  func.func @_matcher_kernel(%arg0: i32, %arg1: i32, %arg2: memref<8x32xf32, #tpu.memory_space<vmem>>, %arg3: memref<8x32xf32, #tpu.memory_space<vmem>>, %arg4: memref<32x32xf32, #tpu.memory_space<vmem>>, %arg5: memref<32x32xf32, #tpu.memory_space<vmem>>, %arg6: memref<3x32xf32, #tpu.memory_space<vmem>>, %arg7: memref<1x1x128xf32, #tpu.memory_space<vmem>>, %arg8: memref<8x1xf32, #tpu.memory_space<vmem>>) attributes {dimension_semantics = [#tpu.dimension_semantics<parallel>, #tpu.dimension_semantics<arbitrary>], iteration_bounds = array<i64: 2, 1>, scalar_prefetch = 0 : i64, scratch_operands = 1 : i64, tpu.core_type = #tpu.core_type<tc>, window_params = [{transform_indices = @transform_0, window_bounds = array<i64: 8, 32>}, {transform_indices = @transform_1, window_bounds = array<i64: 8, 32>}, {pipeline_mode = #tpu.pipeline_mode<synchronous>, transform_indices = @transform_2, window_bounds = array<i64: 32, 32>}, {pipeline_mode = #tpu.pipeline_mode<synchronous>, transform_indices = @transform_3, window_bounds = array<i64: 32, 32>}, {pipeline_mode = #tpu.pipeline_mode<synchronous>, transform_indices = @transform_4, window_bounds = array<i64: 3, 32>}, {transform_indices = @transform_5, window_bounds = array<i64: 1, 1, 128>}]} {
    %c0_i32 = arith.constant 0 : i32
    %0 = arith.cmpi eq, %arg1, %c0_i32 : i32
    %1 = arith.extui %0 : i1 to i32
    %c0_i32_0 = arith.constant 0 : i32
    %2 = arith.cmpi ne, %1, %c0_i32_0 : i32
    scf.if %2 {
      %cst_28 = arith.constant 0.000000e+00 : f32
      %70 = vector.broadcast %cst_28 : f32 to vector<8x1xf32>
      %c0_29 = arith.constant 0 : index
      %c0_30 = arith.constant 0 : index
      %71 = vector.load %arg8[%c0_29, %c0_30] : memref<8x1xf32, #tpu.memory_space<vmem>>, vector<8x1xf32>
      tpu.vector_store %arg8[%c0_29, %c0_30], %70 {strides = array<i32>} : memref<8x1xf32, #tpu.memory_space<vmem>>, vector<8x1xf32>,
    } else {
    }
    %c0 = arith.constant 0 : index
    %c0_1 = arith.constant 0 : index
    %3 = vector.load %arg2[%c0, %c0_1] : memref<8x32xf32, #tpu.memory_space<vmem>>, vector<8x32xf32>
    %c0_2 = arith.constant 0 : index
    %c0_3 = arith.constant 0 : index
    %4 = vector.load %arg3[%c0_2, %c0_3] : memref<8x32xf32, #tpu.memory_space<vmem>>, vector<8x32xf32>
    %c0_4 = arith.constant 0 : index
    %c0_5 = arith.constant 0 : index
    %5 = vector.load %arg6[%c0_4, %c0_5] : memref<3x32xf32, #tpu.memory_space<vmem>>, vector<3x32xf32>
    %6 = vector.extract_strided_slice %5 {offsets = [0, 0], sizes = [1, 32], strides = [1, 1]} : vector<3x32xf32> to vector<1x32xf32>
    %7 = vector.extract_strided_slice %5 {offsets = [1, 0], sizes = [1, 32], strides = [1, 1]} : vector<3x32xf32> to vector<1x32xf32>
    %8 = vector.extract_strided_slice %5 {offsets = [2, 0], sizes = [1, 32], strides = [1, 1]} : vector<3x32xf32> to vector<1x32xf32>
    %c0_6 = arith.constant 0 : index
    %c0_7 = arith.constant 0 : index
    %9 = vector.load %arg4[%c0_6, %c0_7] : memref<32x32xf32, #tpu.memory_space<vmem>>, vector<32x32xf32>
    %cst = arith.constant dense<0.000000e+00> : vector<8x32xf32>
    %10 = tpu.matmul %3, %9, %cst {dimension_numbers = #tpu.dot_dimension_numbers<[1], [0], [0], [1], [0, 0, 1, 1], [], []>} : vector<8x32xf32>, vector<32x32xf32>, vector<8x32xf32> -> vector<8x32xf32>
    %c0_8 = arith.constant 0 : index
    %c0_9 = arith.constant 0 : index
    %11 = vector.load %arg5[%c0_8, %c0_9] : memref<32x32xf32, #tpu.memory_space<vmem>>, vector<32x32xf32>
    %cst_10 = arith.constant dense<0.000000e+00> : vector<8x32xf32>
    %12 = tpu.matmul %4, %11, %cst_10 {dimension_numbers = #tpu.dot_dimension_numbers<[1], [0], [0], [1], [0, 0, 1, 1], [], []>} : vector<8x32xf32>, vector<32x32xf32>, vector<8x32xf32> -> vector<8x32xf32>
    %13 = arith.addf %10, %12 : vector<8x32xf32>
    %14 = vector.broadcast %6 : vector<1x32xf32> to vector<8x32xf32>
    %15 = arith.addf %13, %14 : vector<8x32xf32>
    %cst_11 = arith.constant 0.000000e+00 : f32
    %16 = vector.broadcast %cst_11 : f32 to vector<8x32xf32>
    %17 = arith.maximumf %15, %16 : vector<8x32xf32>
    %cst_12 = arith.constant dense<0.000000e+00> : vector<8xf32>
    %18 = vector.multi_reduction <add>, %17, %cst_12 [1] : vector<8x32xf32> to vector<8xf32>
    %19 = vector.shape_cast %18 : vector<8xf32> to vector<8x1xf32>
    %cst_13 = arith.constant 3.125000e-02 : f32
    %20 = vector.broadcast %cst_13 : f32 to vector<8x1xf32>
    %21 = arith.mulf %19, %20 : vector<8x1xf32>
    %22 = arith.mulf %17, %17 : vector<8x32xf32>
    %cst_14 = arith.constant dense<0.000000e+00> : vector<8xf32>
    %23 = vector.multi_reduction <add>, %22, %cst_14 [1] : vector<8x32xf32> to vector<8xf32>
    %24 = vector.shape_cast %23 : vector<8xf32> to vector<8x1xf32>
    %cst_15 = arith.constant 3.125000e-02 : f32
    %25 = vector.broadcast %cst_15 : f32 to vector<8x1xf32>
    %26 = arith.mulf %24, %25 : vector<8x1xf32>
    %27 = arith.mulf %21, %21 : vector<8x1xf32>
    %28 = arith.subf %26, %27 : vector<8x1xf32>
    %29 = vector.broadcast %21 : vector<8x1xf32> to vector<8x32xf32>
    %30 = arith.subf %17, %29 : vector<8x32xf32>
    %cst_16 = arith.constant 9.99999974E-6 : f32
    %31 = vector.broadcast %cst_16 : f32 to vector<8x1xf32>
    %32 = arith.addf %28, %31 : vector<8x1xf32>
    %33 = math.rsqrt %32 : vector<8x1xf32>
    %34 = vector.broadcast %33 : vector<8x1xf32> to vector<8x32xf32>
    %35 = arith.mulf %30, %34 : vector<8x32xf32>
    %36 = vector.broadcast %7 : vector<1x32xf32> to vector<8x32xf32>
    %37 = arith.mulf %35, %36 : vector<8x32xf32>
    %38 = vector.broadcast %8 : vector<1x32xf32> to vector<8x32xf32>
    %39 = arith.addf %37, %38 : vector<8x32xf32>
    %40 = arith.mulf %39, %3 : vector<8x32xf32>
    %cst_17 = arith.constant dense<0.000000e+00> : vector<8xf32>
    %41 = vector.multi_reduction <add>, %40, %cst_17 [1] : vector<8x32xf32> to vector<8xf32>
    %42 = vector.shape_cast %41 : vector<8xf32> to vector<8x1xf32>
    %43 = arith.mulf %39, %39 : vector<8x32xf32>
    %cst_18 = arith.constant dense<0.000000e+00> : vector<8xf32>
    %44 = vector.multi_reduction <add>, %43, %cst_18 [1] : vector<8x32xf32> to vector<8xf32>
    %45 = vector.shape_cast %44 : vector<8xf32> to vector<8x1xf32>
    %46 = arith.mulf %3, %3 : vector<8x32xf32>
    %cst_19 = arith.constant dense<0.000000e+00> : vector<8xf32>
    %47 = vector.multi_reduction <add>, %46, %cst_19 [1] : vector<8x32xf32> to vector<8xf32>
    %48 = vector.shape_cast %47 : vector<8xf32> to vector<8x1xf32>
    %49 = arith.mulf %45, %48 : vector<8x1xf32>
    %cst_20 = arith.constant 1.000000e-16 : f32
    %50 = vector.broadcast %cst_20 : f32 to vector<8x1xf32>
    %51 = arith.maximumf %49, %50 : vector<8x1xf32>
    %52 = math.rsqrt %51 : vector<8x1xf32>
    %53 = arith.mulf %42, %52 : vector<8x1xf32>
    %c1_i32 = arith.constant 1 : i32
    %54 = arith.muli %arg0, %c1_i32 : i32
    %55 = arith.addi %54, %arg1 : i32
    %56 = tpu.iota {dimensions = array<i32: 0>} : vector<8x1xi32>
    %c8_i32 = arith.constant 8 : i32
    %57 = arith.muli %55, %c8_i32 : i32
    %58 = vector.broadcast %57 : i32 to vector<8x1xi32>
    %59 = arith.addi %56, %58 : vector<8x1xi32>
    %c16_i32 = arith.constant 16 : i32
    %60 = vector.broadcast %c16_i32 : i32 to vector<8x1xi32>
    %61 = arith.cmpi slt, %59, %60 : vector<8x1xi32>
    %cst_21 = arith.constant 0.000000e+00 : f32
    %62 = vector.broadcast %cst_21 : f32 to vector<8x1xf32>
    %63 = arith.select %61, %53, %62 : vector<8x1xi1>, vector<8x1xf32>
    %c0_22 = arith.constant 0 : index
    %c0_23 = arith.constant 0 : index
    %64 = vector.load %arg8[%c0_22, %c0_23] : memref<8x1xf32, #tpu.memory_space<vmem>>, vector<8x1xf32>
    %65 = arith.addf %64, %63 : vector<8x1xf32>
    %c0_24 = arith.constant 0 : index
    %c0_25 = arith.constant 0 : index
    %66 = vector.load %arg8[%c0_24, %c0_25] : memref<8x1xf32, #tpu.memory_space<vmem>>, vector<8x1xf32>
    tpu.vector_store %arg8[%c0_24, %c0_25], %65 {strides = array<i32>} : memref<8x1xf32, #tpu.memory_space<vmem>>, vector<8x1xf32>,
    %c0_i32_26 = arith.constant 0 : i32
    %67 = arith.cmpi eq, %arg1, %c0_i32_26 : i32
    %68 = arith.extui %67 : i1 to i32
    %c0_i32_27 = arith.constant 0 : i32
    %69 = arith.cmpi ne, %68, %c0_i32_27 : i32
    scf.if %69 {
      %c0_28 = arith.constant 0 : index
      %c0_29 = arith.constant 0 : index
      %70 = vector.load %arg8[%c0_28, %c0_29] : memref<8x1xf32, #tpu.memory_space<vmem>>, vector<8x1xf32>
      %71 = vector.shape_cast %70 : vector<8x1xf32> to vector<1x8x1xf32>
      %cst_30 = arith.constant dense<0.000000e+00> : vector<1xf32>
      %72 = vector.multi_reduction <add>, %71, %cst_30 [1, 2] : vector<1x8x1xf32> to vector<1xf32>
      %73 = vector.shape_cast %72 : vector<1xf32> to vector<1x1x1xf32>
      %74 = vector.extract %73[0, 0, 0] : f32 from vector<1x1x1xf32>
      %75 = vector.broadcast %74 : f32 to vector<1x1x128xf32>
      %c0_31 = arith.constant 0 : index
      %c0_32 = arith.constant 0 : index
      %c0_33 = arith.constant 0 : index
      %76 = vector.load %arg7[%c0_31, %c0_32, %c0_33] : memref<1x1x128xf32, #tpu.memory_space<vmem>>, vector<1x1x128xf32>
      tpu.vector_store %arg7[%c0_31, %c0_32, %c0_33], %75 {strides = array<i32>} : memref<1x1x128xf32, #tpu.memory_space<vmem>>, vector<1x1x128xf32>,
    } else {
    }
    return
  }
  func.func @transform_0(%arg0: i32, %arg1: i32) -> (i32, i32) {
    %c1_i32 = arith.constant 1 : i32
    %0 = arith.muli %arg0, %c1_i32 : i32
    %1 = arith.addi %0, %arg1 : i32
    %c0_i32 = arith.constant 0 : i32
    %c0_i32_0 = arith.constant 0 : i32
    return %1, %c0_i32 : i32, i32
  }
  func.func @transform_1(%arg0: i32, %arg1: i32) -> (i32, i32) {
    %c1_i32 = arith.constant 1 : i32
    %0 = arith.muli %arg0, %c1_i32 : i32
    %1 = arith.addi %0, %arg1 : i32
    %c0_i32 = arith.constant 0 : i32
    %c0_i32_0 = arith.constant 0 : i32
    return %1, %c0_i32 : i32, i32
  }
  func.func @transform_2(%arg0: i32, %arg1: i32) -> (i32, i32) {
    %c0_i32 = arith.constant 0 : i32
    %c0_i32_0 = arith.constant 0 : i32
    %c0_i32_1 = arith.constant 0 : i32
    return %c0_i32, %c0_i32_0 : i32, i32
  }
  func.func @transform_3(%arg0: i32, %arg1: i32) -> (i32, i32) {
    %c0_i32 = arith.constant 0 : i32
    %c0_i32_0 = arith.constant 0 : i32
    %c0_i32_1 = arith.constant 0 : i32
    return %c0_i32, %c0_i32_0 : i32, i32
  }
  func.func @transform_4(%arg0: i32, %arg1: i32) -> (i32, i32) {
    %c0_i32 = arith.constant 0 : i32
    %c0_i32_0 = arith.constant 0 : i32
    %c0_i32_1 = arith.constant 0 : i32
    return %c0_i32, %c0_i32_0 : i32, i32
  }
  func.func @transform_5(%arg0: i32, %arg1: i32) -> (i32, i32, i32) {
    %c0_i32 = arith.constant 0 : i32
    %c0_i32_0 = arith.constant 0 : i32
    %c0_i32_1 = arith.constant 0 : i32
    return %arg0, %c0_i32, %c0_i32_0 : i32, i32, i32
  }
}

</mosaic_0001>

<llo_original>
// kernel: tpu_custom_call.1
$region0: #{tpu_custom_call.1}
  #allocation0 [shape = 'u32[]', space=smem, size = 0x4, offset = 0x4, fixed_abs, tag = 'smem constant byte address 0x4 - core index']
  #allocation1 [shape = 'u32[144,128]{1,0:T(1,128)}', space=vmem, size = 0x12000, scoped, tag = 'internal scratch']
  #allocation2 [shape = 'f32[8,1]{1,0:T(8,128)}', space=vmem, size = 0x1000, scoped, tag = 'scratch operand']
  %s0 = inlined_call_operand.hbm [shape: f32[16,32], index: 0, kind: input, shape index: {}]
  %s1 = inlined_call_operand.hbm [shape: f32[16,32], index: 1, kind: input, shape index: {}]
  %s2 = inlined_call_operand.hbm [shape: f32[32,32], index: 2, kind: input, shape index: {}]
  %s3 = inlined_call_operand.hbm [shape: f32[32,32], index: 3, kind: input, shape index: {}]
  %s4 = inlined_call_operand.vmem [shape: f32[3,32], index: 4, kind: input, shape index: {}]
  %s5 = inlined_call_operand.hbm [shape: f32[2,1,128], index: 5, kind: output, shape index: {}]
  %s6 = sld [smem:[#allocation0]]
  $region77: #{tpu_custom_call.1} parent=0
    _
  %s8 = ssub.s32 1, %s6
  %s9 = scalar_select 0, %s8, %s6
  $region1: #{tpu_custom_call.1} parent=0
    #allocation3 [shape = 'u8[8192]{0}', space=vmem, size = 0x2000, scoped, tag = 'input window, operand 0']
    #allocation4 [shape = 's32[2]{0}', space=sflag, size = 0x8, scoped, tag = 'scoped memory for tpu_custom_call.1']
    #allocation5 [shape = 's32[2]{0}', space=sflag, size = 0x8, scoped, tag = 'scoped memory for tpu_custom_call.1']
    #allocation6 [shape = 'u8[8192]{0}', space=vmem, size = 0x2000, scoped, tag = 'input window, operand 1']
    #allocation7 [shape = 's32[2]{0}', space=sflag, size = 0x8, scoped, tag = 'scoped memory for tpu_custom_call.1']
    #allocation8 [shape = 'u8[16384]{0}', space=vmem, size = 0x4000, scoped, tag = 'input window, operand 2, single buffered']
    #allocation9 [shape = 'u8[16384]{0}', space=vmem, size = 0x4000, scoped, tag = 'input window, operand 3, single buffered']
    #allocation10 [shape = 's32[1]{0}', space=sflag, size = 0x4, scoped, tag = 'scoped memory for tpu_custom_call.1']
    #allocation11 [shape = 'u8[1024]{0}', space=vmem, size = 0x400, scoped, tag = 'output window, operand 0']
    %10 = vsyncpa [#allocation4], 0
    %s11 = scalar_lea.sflag [#allocation4], 1
    %12 = vsyncpa %s11, 0
    %13 = vsyncpa [#allocation7], 0
    %s14 = scalar_lea.sflag [#allocation7], 1
    %15 = vsyncpa %s14, 0
    %16 = vsyncpa [#allocation10], 0
    %17 = vsyncpa [#allocation5], 0
    %s18 = scalar_lea.sflag [#allocation5], 1
    %19 = vsyncpa %s18, 0
    loop: start=0, step=1, limit=4
    $region2: #{tpu_custom_call.1} parent=1 // loop_pre_header
      _
    $region3: #{tpu_custom_call.1} parent=1 // loop_header
      %s21 = sphi 0, %s25
      %p22 = scmp.ge.s32.totalorder %s21, 4
      %s28 = sphi 0, %s40
      %s29 = sphi 0, %s36
      %s30 = sphi 0, %s28
      %s31 = sphi 0, %s29
      %s32 = sphi 0, %s30
      %s33 = sphi 0, %s31
      %s45 = sphi 0, %s47
      %s48 = sphi 0, %s45
      %s49 = sphi 0, %s48
      %s65 = sphi 0, %s49
      %s73 = sphi 0, %s75
      %s76 = sphi 0, %s73
      %s77 = sphi 0, %s76
      %s93 = sphi 0, %s77
      %s97 = sphi 0, %s97
      %s99 = sphi 0, %s97
      %s100 = sphi 0, %s99
      %s114 = sphi 0, %s100
      %s118 = sphi 0, %s118
      %s120 = sphi 0, %s118
      %s121 = sphi 0, %s120
      %s135 = sphi 0, %s121
      %s139 = sphi 0, %s139
      %s141 = sphi 0, %s139
      %s142 = sphi 0, %s141
      %s156 = sphi 0, %s142
      %s162 = sphi 0, %s164
      %s165 = sphi 0, %s162
      %s166 = sphi 0, %s165
      %s182 = sphi 0, %s166
    $region4: #{tpu_custom_call.1} parent=1 // loop_header_branch
      %24 = sbr.rel (%p22) target = $region8
    $region5: #{tpu_custom_call.1} parent=1 // loop_body
      %s26 = ssub.s32 %s21, 1
      %s27 = ssub.s32 %s21, 2
      %s34 = sadd.s32 1, %s29
      %p35 = scmp.ge.s32.totalorder %s34, 1
      %s36 = scalar_select %p35, 0, %s34
      %s37 = sadd.s32 1, %s28
      %s38 = scalar_select %p35, %s37, %s28
      %p39 = scmp.ge.s32.totalorder %s38, 2
      %s40 = scalar_select %p39, 0, %s38
      %s41 = sadd.s32 %s28, %s29
      %s42 = sadd.s32 %s40, %s36
      %s43 = ssub.s32 %s41, %s42
      %p44 = scmp.eq.s32.totalorder %s43, 0
      %s46 = sadd.s32 %s45, 1
      %s47 = scalar_select %p44, %s45, %s46
      %p50 = pneg %p44
      %p51 = scmp.eq.s32.totalorder %s21, 1
      %p52 = por %p50, %p51
      %p53 = scmp.ne.s32.totalorder %s45, %s48
      %p54 = scmp.eq.s32.totalorder %s21, 0
      %p55 = por %p53, %p54
      %p56 = scmp.ne.s32.totalorder %s45, %s48
      %p57 = scmp.eq.s32.totalorder %s26, 1
      %p58 = por %p56, %p57
      %p59 = scmp.ne.s32.totalorder %s48, %s49
      %p60 = scmp.eq.s32.totalorder %s26, 0
      %p61 = por %p59, %p60
      %p62 = scmp.ne.s32.totalorder %s48, %s49
      %p63 = scmp.eq.s32.totalorder %s27, 1
      %p64 = por %p62, %p63
      %p66 = scmp.ne.s32.totalorder %s49, %s65
      %p67 = scmp.eq.s32.totalorder %s27, 0
      %p68 = por %p66, %p67
      %s69 = sadd.s32 %s28, %s29
      %s70 = sadd.s32 %s40, %s36
      %s71 = ssub.s32 %s69, %s70
      %p72 = scmp.eq.s32.totalorder %s71, 0
      %s74 = sadd.s32 %s73, 1
      %s75 = scalar_select %p72, %s73, %s74
      %p78 = pneg %p72
      %p79 = scmp.eq.s32.totalorder %s21, 1
      %p80 = por %p78, %p79
      %p81 = scmp.ne.s32.totalorder %s73, %s76
      %p82 = scmp.eq.s32.totalorder %s21, 0
      %p83 = por %p81, %p82
      %p84 = scmp.ne.s32.totalorder %s73, %s76
      %p85 = scmp.eq.s32.totalorder %s26, 1
      %p86 = por %p84, %p85
      %p87 = scmp.ne.s32.totalorder %s76, %s77
      %p88 = scmp.eq.s32.totalorder %s26, 0
      %p89 = por %p87, %p88
      %p90 = scmp.ne.s32.totalorder %s76, %s77
      %p91 = scmp.eq.s32.totalorder %s27, 1
      %p92 = por %p90, %p91
      %p94 = scmp.ne.s32.totalorder %s77, %s93
      %p95 = scmp.eq.s32.totalorder %s27, 0
      %p96 = por %p94, %p95
      %s98 = sadd.s32 %s97, 1
      %p101 = scmp.eq.s32.totalorder %s21, 1
      %p102 = scmp.ne.s32.totalorder %s97, %s99
      %p103 = scmp.eq.s32.totalorder %s21, 0
      %p104 = por %p102, %p103
      %p105 = scmp.ne.s32.totalorder %s97, %s99
      %p106 = scmp.eq.s32.totalorder %s26, 1
      %p107 = por %p105, %p106
      %p108 = scmp.ne.s32.totalorder %s99, %s100
      %p109 = scmp.eq.s32.totalorder %s26, 0
      %p110 = por %p108, %p109
      %p111 = scmp.ne.s32.totalorder %s99, %s100
      %p112 = scmp.eq.s32.totalorder %s27, 1
      %p113 = por %p111, %p112
      %p115 = scmp.ne.s32.totalorder %s100, %s114
      %p116 = scmp.eq.s32.totalorder %s27, 0
      %p117 = por %p115, %p116
      %s119 = sadd.s32 %s118, 1
      %p122 = scmp.eq.s32.totalorder %s21, 1
      %p123 = scmp.ne.s32.totalorder %s118, %s120
      %p124 = scmp.eq.s32.totalorder %s21, 0
      %p125 = por %p123, %p124
      %p126 = scmp.ne.s32.totalorder %s118, %s120
      %p127 = scmp.eq.s32.totalorder %s26, 1
      %p128 = por %p126, %p127
      %p129 = scmp.ne.s32.totalorder %s120, %s121
      %p130 = scmp.eq.s32.totalorder %s26, 0
      %p131 = por %p129, %p130
      %p132 = scmp.ne.s32.totalorder %s120, %s121
      %p133 = scmp.eq.s32.totalorder %s27, 1
      %p134 = por %p132, %p133
      %p136 = scmp.ne.s32.totalorder %s121, %s135
      %p137 = scmp.eq.s32.totalorder %s27, 0
      %p138 = por %p136, %p137
      %s140 = sadd.s32 %s139, 1
      %p143 = scmp.eq.s32.totalorder %s21, 1
      %p144 = scmp.ne.s32.totalorder %s139, %s141
      %p145 = scmp.eq.s32.totalorder %s21, 0
      %p146 = por %p144, %p145
      %p147 = scmp.ne.s32.totalorder %s139, %s141
      %p148 = scmp.eq.s32.totalorder %s26, 1
      %p149 = por %p147, %p148
      %p150 = scmp.ne.s32.totalorder %s141, %s142
      %p151 = scmp.eq.s32.totalorder %s26, 0
      %p152 = por %p150, %p151
      %p153 = scmp.ne.s32.totalorder %s141, %s142
      %p154 = scmp.eq.s32.totalorder %s27, 1
      %p155 = por %p153, %p154
      %p157 = scmp.ne.s32.totalorder %s142, %s156
      %p158 = scmp.eq.s32.totalorder %s27, 0
      %p159 = por %p157, %p158
      %s160 = ssub.s32 %s28, %s40
      %p161 = scmp.eq.s32.totalorder %s160, 0
      %s163 = sadd.s32 %s162, 1
      %s164 = scalar_select %p161, %s162, %s163
      %p167 = pneg %p161
      %p168 = scmp.eq.s32.totalorder %s21, 1
      %p169 = por %p167, %p168
      %p170 = scmp.ne.s32.totalorder %s162, %s165
      %p171 = scmp.eq.s32.totalorder %s21, 0
      %p172 = por %p170, %p171
      %p173 = scmp.ne.s32.totalorder %s162, %s165
      %p174 = scmp.eq.s32.totalorder %s26, 1
      %p175 = por %p173, %p174
      %p176 = scmp.ne.s32.totalorder %s165, %s166
      %p177 = scmp.eq.s32.totalorder %s26, 0
      %p178 = por %p176, %p177
      %p179 = scmp.ne.s32.totalorder %s165, %s166
      %p180 = scmp.eq.s32.totalorder %s27, 1
      %p181 = por %p179, %p180
      %p183 = scmp.ne.s32.totalorder %s166, %s182
      %p184 = scmp.eq.s32.totalorder %s27, 0
      %p185 = por %p183, %p184
      %p186 = scmp.le.s32.totalorder 1, %s21
      %p187 = scmp.lt.s32.totalorder %s21, 3
      %p188 = pnand %p186, %p187
      %p189 = pneg %p188
      // Predicated region
      $region9: #{tpu_custom_call.1} parent=5 // pred_check
        _
      $region10: #{tpu_custom_call.1} parent=5 // pred_check_branch
        %191 = sbr.rel (%p188) target = $region12
      $region11: #{tpu_custom_call.1} parent=5 // pred_region
        %s192 = ssub.s32 %s21, 1
        // Predicated region
        $region13: #{tpu_custom_call.1} parent=11 // pred_check
          %p193 = pneg %p110
        $region14: #{tpu_custom_call.1} parent=11 // pred_check_branch
          %195 = sbr.rel (%p193) target = $region16
        $region15: #{tpu_custom_call.1} parent=11 // pred_region
          %s197 = ssub.s32 512, 512
          %198 = vsyncadd [#allocation7], %s197
          %s199 = sshll.u32 [#allocation8], 4
          %s200 = int_to_ptr.vmem [resolvable:$true] %s199
          %205 = dma.hbm_to_vmem [thread:$0]  %s2, 512, %s200, [#allocation7], 128, 128, 8
        $region16: #{tpu_custom_call.1} parent=11 // pred_fallthru
          _
        // Predicated region
        $region17: #{tpu_custom_call.1} parent=11 // pred_check
          %p206 = pneg %p131
        $region18: #{tpu_custom_call.1} parent=11 // pred_check_branch
          %208 = sbr.rel (%p206) target = $region20
        $region19: #{tpu_custom_call.1} parent=11 // pred_region
          %s210 = ssub.s32 512, 512
          %211 = vsyncadd [#allocation10], %s210
          %s212 = sshll.u32 [#allocation9], 4
          %s213 = int_to_ptr.vmem [resolvable:$true] %s212
          %218 = dma.hbm_to_vmem [thread:$0]  %s3, 512, %s213, [#allocation10], 128, 128, 8
        $region20: #{tpu_custom_call.1} parent=11 // pred_fallthru
          _
        // Predicated region
        $region21: #{tpu_custom_call.1} parent=11 // pred_check
          %p219 = pneg %p152
        $region22: #{tpu_custom_call.1} parent=11 // pred_check_branch
          %221 = sbr.rel (%p219) target = $region24
        $region23: #{tpu_custom_call.1} parent=11 // pred_region
          _
        $region24: #{tpu_custom_call.1} parent=11 // pred_fallthru
          _
      $region12: #{tpu_custom_call.1} parent=5 // pred_fallthru
        _
      %p222 = scmp.lt.s32.totalorder %s21, 2
      // Predicated region
      $region25: #{tpu_custom_call.1} parent=5 // pred_check
        %p223 = pneg %p222
      $region26: #{tpu_custom_call.1} parent=5 // pred_check_branch
        %225 = sbr.rel (%p223) target = $region28
      $region27: #{tpu_custom_call.1} parent=5 // pred_region
        // Predicated region
        $region29: #{tpu_custom_call.1} parent=27 // pred_check
          %p226 = pneg %p55
        $region30: #{tpu_custom_call.1} parent=27 // pred_check_branch
          %228 = sbr.rel (%p226) target = $region32
        $region31: #{tpu_custom_call.1} parent=27 // pred_region
          %s229 = sand.u32 %s45, 1
          %s230 = scalar_lea.sflag [#allocation4], %s229
          %s231 = sand.u32 %s45, 1
          %s232 = smul.addr %s231, 8
          %s233 = scalar_lea.vmem [#allocation3], %s232
          %s234 = sadd.s32 %s28, %s29
          %s236 = ssub.s32 128, 128
          %237 = vsyncadd %s230, %s236
          %s238 = smul.addr %s234, 128
          %s239 = scalar_lea.hbm %s0, %s238
          %s241 = sshll.u32 %s233, 4
          %s242 = int_to_ptr.vmem [resolvable:$true] %s241
          %244 = dma.hbm_to_vmem [thread:$0]  %s239, 128, %s242, %s230
        $region32: #{tpu_custom_call.1} parent=27 // pred_fallthru
          _
        // Predicated region
        $region33: #{tpu_custom_call.1} parent=27 // pred_check
          %p245 = pneg %p83
        $region34: #{tpu_custom_call.1} parent=27 // pred_check_branch
          %247 = sbr.rel (%p245) target = $region36
        $region35: #{tpu_custom_call.1} parent=27 // pred_region
          %s248 = sand.u32 %s21, 1
          %s249 = scalar_lea.sflag [#allocation7], %s248
          %s250 = sand.u32 %s73, 1
          %s251 = smul.addr %s250, 8
          %s252 = scalar_lea.vmem [#allocation6], %s251
          %s253 = sadd.s32 %s28, %s29
          %s255 = ssub.s32 128, 128
          %256 = vsyncadd %s249, %s255
          %s257 = smul.addr %s253, 128
          %s258 = scalar_lea.hbm %s1, %s257
          %s260 = sshll.u32 %s252, 4
          %s261 = int_to_ptr.vmem [resolvable:$true] %s260
          %263 = dma.hbm_to_vmem [thread:$0]  %s258, 128, %s261, %s249
        $region36: #{tpu_custom_call.1} parent=27 // pred_fallthru
          _
      $region28: #{tpu_custom_call.1} parent=5 // pred_fallthru
        _
      %p264 = scmp.le.s32.totalorder 1, %s21
      %p265 = scmp.lt.s32.totalorder %s21, 3
      %p266 = pnand %p264, %p265
      %p267 = pneg %p266
      // Predicated region
      $region37: #{tpu_custom_call.1} parent=5 // pred_check
        _
      $region38: #{tpu_custom_call.1} parent=5 // pred_check_branch
        %269 = sbr.rel (%p266) target = $region40
      $region39: #{tpu_custom_call.1} parent=5 // pred_region
        %s270 = ssub.s32 %s21, 1
        %s271 = sand.u32 %s48, 1
        %s272 = scalar_lea.sflag [#allocation4], %s271
        %s273 = sand.u32 %s48, 1
        %s274 = smul.addr %s273, 8
        %s275 = scalar_lea.vmem [#allocation3], %s274
        // Predicated region
        $region41: #{tpu_custom_call.1} parent=39 // pred_check
          %p276 = pneg %p61
        $region42: #{tpu_custom_call.1} parent=39 // pred_check_branch
          %278 = sbr.rel (%p276) target = $region44
        $region43: #{tpu_custom_call.1} parent=39 // pred_region
          %279 = dma.done %s272, 128
        $region44: #{tpu_custom_call.1} parent=39 // pred_fallthru
          _
        %s280 = sand.u32 %s26, 1
        %s281 = scalar_lea.sflag [#allocation7], %s280
        %s282 = sand.u32 %s76, 1
        %s283 = smul.addr %s282, 8
        %s284 = scalar_lea.vmem [#allocation6], %s283
        // Predicated region
        $region45: #{tpu_custom_call.1} parent=39 // pred_check
          %p285 = pneg %p89
        $region46: #{tpu_custom_call.1} parent=39 // pred_check_branch
          %287 = sbr.rel (%p285) target = $region48
        $region47: #{tpu_custom_call.1} parent=39 // pred_region
          %288 = dma.done %s281, 128
        $region48: #{tpu_custom_call.1} parent=39 // pred_fallthru
          _
        // Predicated region
        $region49: #{tpu_custom_call.1} parent=39 // pred_check
          %p289 = pneg %p110
        $region50: #{tpu_custom_call.1} parent=39 // pred_check_branch
          %291 = sbr.rel (%p289) target = $region52
        $region51: #{tpu_custom_call.1} parent=39 // pred_region
          %292 = dma.done [#allocation7], 512
        $region52: #{tpu_custom_call.1} parent=39 // pred_fallthru
          _
        // Predicated region
        $region53: #{tpu_custom_call.1} parent=39 // pred_check
          %p293 = pneg %p131
        $region54: #{tpu_custom_call.1} parent=39 // pred_check_branch
          %295 = sbr.rel (%p293) target = $region56
        $region55: #{tpu_custom_call.1} parent=39 // pred_region
          %296 = dma.done [#allocation10], 512
        $region56: #{tpu_custom_call.1} parent=39 // pred_fallthru
          _
        %s297 = sand.u32 %s48, 1
        %s298 = scalar_lea.sflag [#allocation4], %s297
        %s299 = sand.u32 %s48, 1
        %s300 = smul.addr %s299, 8
        %s301 = scalar_lea.vmem [#allocation3], %s300
        %p302 = pneg %p61
        %p303 = pneg %p58
        %s304 = sand.u32 %s26, 1
        %s305 = scalar_lea.sflag [#allocation7], %s304
        %s306 = sand.u32 %s76, 1
        %s307 = smul.addr %s306, 8
        %s308 = scalar_lea.vmem [#allocation6], %s307
        %p309 = pneg %p89
        %p310 = pneg %p86
        %p311 = pneg %p110
        %p312 = pneg %p107
        %p313 = pneg %p131
        %p314 = pneg %p128
        %p315 = pneg %p152
        %p316 = pneg %p149
        %p317 = pneg %p178
        %p318 = pneg %p175
        %s319 = sand.u32 %s165, 1
        %s320 = scalar_lea.sflag [#allocation5], %s319
        %s321 = sand.u32 %s165, 1
        %s322 = scalar_lea.vmem [#allocation11], %s321
        %s323 = sadd.s32 %s30, %s31
        %s324 = sadd.s32 %s30, %s31
        %p325 = scmp.eq.s32.totalorder %s31, 0
        // Predicated region
        $region57: #{tpu_custom_call.1} parent=39 // pred_check
          %p326 = pneg %p325
        $region58: #{tpu_custom_call.1} parent=39 // pred_check_branch
          %328 = sbr.rel (%p326) target = $region60
        $region59: #{tpu_custom_call.1} parent=39 // pred_region
          %vm329 = vcmask 7168
          %330 = vst.msk [vmem:[#allocation2] sm:$0xff] %vm329, 0.0
        $region60: #{tpu_custom_call.1} parent=39 // pred_fallthru
          _
        %v331 = vld [vmem:[%s275] sm:$0xff]
        %v332 = vld [vmem:[%s284] sm:$0xff]
        %v333 = vld [vmem:[%s4] sm:$0x7]
        %v334 = vld [vmem:[#allocation8] sm:$0xff]
        %v335 = vld [vmem:[#allocation8 + $0x8] sm:$0xff]
        %v336 = vld [vmem:[#allocation8 + $0x10] sm:$0xff]
        %v337 = vld [vmem:[#allocation8 + $0x18] sm:$0xff]
        %v338 = vld [vmem:[#allocation9] sm:$0xff]
        %v339 = vld [vmem:[#allocation9 + $0x8] sm:$0xff]
        %v340 = vld [vmem:[#allocation9 + $0x10] sm:$0xff]
        %v341 = vld [vmem:[#allocation9 + $0x18] sm:$0xff]
        %vm342 = vcmask 261120
        %v344 = vsel %vm342, %v332, 0
        %346 = vmatprep.subr.mxu0 0.0
        %347 = vmatpush1.msra.mxu0 %v338
        %348 = vmatprep.subr.mxu0 0.0
        %349 = vmatpush1.msra.mxu0 %v339
        %350 = vmatprep.subr.mxu0 0.0
        %351 = vmatpush1.msra.mxu0 %v340
        %352 = vmatprep.subr.mxu0 0.0
        %353 = vmatpush1.msra.mxu0 %v341
        %354 = vmatprep.subr.mxu0 0.0
        %355 = vmatpush1.msra.mxu0 0.0
        %356 = vmatprep.subr.mxu0 0.0
        %357 = vmatpush1.msra.mxu0 0.0
        %358 = vmatprep.subr.mxu0 0.0
        %359 = vmatpush1.msra.mxu0 0.0
        %360 = vmatprep.subr.mxu0 0.0
        %361 = vmatpush1.msra.mxu0 0.0
        %362 = vmatprep.subr.mxu0 0.0
        %363 = vmatpush1.msra.mxu0 0.0
        %364 = vmatprep.subr.mxu0 0.0
        %365 = vmatpush1.msra.mxu0 0.0
        %366 = vmatprep.subr.mxu0 0.0
        %367 = vmatpush1.msra.mxu0 0.0
        %368 = vmatprep.subr.mxu0 0.0
        %369 = vmatpush1.msra.mxu0 0.0
        %370 = vmatprep.subr.mxu0 0.0
        %371 = vmatpush1.msra.mxu0 0.0
        %372 = vmatprep.subr.mxu0 0.0
        %373 = vmatpush1.msra.mxu0 0.0
        %374 = vmatprep.subr.mxu0 0.0
        %375 = vmatpush1.msra.mxu0 0.0
        %376 = vmatprep.subr.mxu0 0.0
        %377 = vmatpush1.msra.mxu0 0.0
        %378 = vmatprep.subr.mxu0 0.0
        %379 = vmatpush1.msra.mxu0 0.0
        %380 = vmatprep.subr.mxu0 0.0
        %381 = vmatpush1.msra.mxu0 0.0
        %382 = vmatprep.subr.mxu0 0.0
        %383 = vmatpush1.msra.mxu0 0.0
        %384 = vmatprep.subr.mxu0 0.0
        %385 = vmatpush1.msra.mxu0 0.0
        %386 = vmatprep.subr.mxu0 0.0
        %387 = vmatpush1.msra.mxu0 0.0
        %388 = vmatprep.subr.mxu0 0.0
        %389 = vmatpush1.msra.mxu0 0.0
        %390 = vmatprep.subr.mxu0 0.0
        %391 = vmatpush1.msra.mxu0 0.0
        %392 = vmatprep.subr.mxu0 0.0
        %393 = vmatpush1.msra.mxu0 0.0
        %394 = vmatprep.subr.mxu0 0.0
        %395 = vmatpush1.msra.mxu0 0.0
        %396 = vmatprep.subr.mxu0 0.0
        %397 = vmatpush1.msra.mxu0 0.0
        %398 = vmatprep.subr.mxu0 0.0
        %399 = vmatpush1.msra.mxu0 0.0
        %400 = vmatprep.subr.mxu0 0.0
        %401 = vmatpush1.msra.mxu0 0.0
        %402 = vmatprep.subr.mxu0 0.0
        %403 = vmatpush1.msra.mxu0 0.0
        %404 = vmatprep.subr.mxu0 0.0
        %405 = vmatpush1.msra.mxu0 0.0
        %406 = vmatprep.subr.mxu0 0.0
        %407 = vmatpush1.msra.mxu0 0.0
        %408 = vmatprep.subr.mxu0 0.0
        %409 = vmatpush1.msra.mxu0 0.0
        %410 = vmatprep.mubr.f32.mxu0 0.0
        %411 = vmatmul.mubr.f32.gmra.mrb[0].mxu0 %v344
        %v412 = vpop.f32.mrb[0].mxu0
        %v413 = vadd.f32 0.0, %v412
        %v414 = vpop.f32.mrb[0].mxu0
        %415 = vdwg.mxu0
        %v417 = vsel %vm342, %v331, 0
        %419 = vmatprep.subr.mxu0 0.0
        %420 = vmatpush1.msra.mxu0 %v334
        %421 = vmatprep.subr.mxu0 0.0
        %422 = vmatpush1.msra.mxu0 %v335
        %423 = vmatprep.subr.mxu0 0.0
        %424 = vmatpush1.msra.mxu0 %v336
        %425 = vmatprep.subr.mxu0 0.0
        %426 = vmatpush1.msra.mxu0 %v337
        %427 = vmatprep.subr.mxu0 0.0
        %428 = vmatpush1.msra.mxu0 0.0
        %429 = vmatprep.subr.mxu0 0.0
        %430 = vmatpush1.msra.mxu0 0.0
        %431 = vmatprep.subr.mxu0 0.0
        %432 = vmatpush1.msra.mxu0 0.0
        %433 = vmatprep.subr.mxu0 0.0
        %434 = vmatpush1.msra.mxu0 0.0
        %435 = vmatprep.subr.mxu0 0.0
        %436 = vmatpush1.msra.mxu0 0.0
        %437 = vmatprep.subr.mxu0 0.0
        %438 = vmatpush1.msra.mxu0 0.0
        %439 = vmatprep.subr.mxu0 0.0
        %440 = vmatpush1.msra.mxu0 0.0
        %441 = vmatprep.subr.mxu0 0.0
        %442 = vmatpush1.msra.mxu0 0.0
        %443 = vmatprep.subr.mxu0 0.0
        %444 = vmatpush1.msra.mxu0 0.0
        %445 = vmatprep.subr.mxu0 0.0
        %446 = vmatpush1.msra.mxu0 0.0
        %447 = vmatprep.subr.mxu0 0.0
        %448 = vmatpush1.msra.mxu0 0.0
        %449 = vmatprep.subr.mxu0 0.0
        %450 = vmatpush1.msra.mxu0 0.0
        %451 = vmatprep.subr.mxu0 0.0
        %452 = vmatpush1.msra.mxu0 0.0
        %453 = vmatprep.subr.mxu0 0.0
        %454 = vmatpush1.msra.mxu0 0.0
        %455 = vmatprep.subr.mxu0 0.0
        %456 = vmatpush1.msra.mxu0 0.0
        %457 = vmatprep.subr.mxu0 0.0
        %458 = vmatpush1.msra.mxu0 0.0
        %459 = vmatprep.subr.mxu0 0.0
        %460 = vmatpush1.msra.mxu0 0.0
        %461 = vmatprep.subr.mxu0 0.0
        %462 = vmatpush1.msra.mxu0 0.0
        %463 = vmatprep.subr.mxu0 0.0
        %464 = vmatpush1.msra.mxu0 0.0
        %465 = vmatprep.subr.mxu0 0.0
        %466 = vmatpush1.msra.mxu0 0.0
        %467 = vmatprep.subr.mxu0 0.0
        %468 = vmatpush1.msra.mxu0 0.0
        %469 = vmatprep.subr.mxu0 0.0
        %470 = vmatpush1.msra.mxu0 0.0
        %471 = vmatprep.subr.mxu0 0.0
        %472 = vmatpush1.msra.mxu0 0.0
        %473 = vmatprep.subr.mxu0 0.0
        %474 = vmatpush1.msra.mxu0 0.0
        %475 = vmatprep.subr.mxu0 0.0
        %476 = vmatpush1.msra.mxu0 0.0
        %477 = vmatprep.subr.mxu0 0.0
        %478 = vmatpush1.msra.mxu0 0.0
        %479 = vmatprep.subr.mxu0 0.0
        %480 = vmatpush1.msra.mxu0 0.0
        %481 = vmatprep.subr.mxu0 0.0
        %482 = vmatpush1.msra.mxu0 0.0
        %483 = vmatprep.mubr.f32.mxu0 0.0
        %484 = vmatmul.mubr.f32.gmra.mrb[0].mxu0 %v417
        %v485 = vpop.f32.mrb[0].mxu0
        %v486 = vadd.f32 %v413, %v485
        %v487 = vpop.f32.mrb[0].mxu0
        %488 = vdwg.mxu0
        %v489 = vlaneseq
        %v490 = vshrl.u32 %v489, 7
        %v491 = vsub.s32 0, %v490
        %v492 = vrot.slane %v333, %v491
        %v493 = vadd.f32 %v486, %v492
        %v494 = vmax.f32 %v493, 0.0
        %v495 = vsel %vm342, %v494, 0.0
        %496 = vadd.xlane.f32.xlu0 %v495
        %v497 = vpop.xlane.xlu0 %496
        %v498 = vmul.f32 %v497, 0.03125
        %v499 = vmul.f32 %v494, %v494
        %v500 = vsel %vm342, %v499, 0.0
        %501 = vadd.xlane.f32.xlu0 %v500
        %v502 = vpop.xlane.xlu0 %501
        %v503 = vmul.f32 %v502, 0.03125
        %v504 = vmul.f32 %v498, %v498
        %v505 = vsub.f32 %v503, %v504
        %v506 = vsub.f32 %v494, %v498
        %v507 = vadd.f32 %v505, 1e-05
        %v508 = vrsqrt.pop %v507
        %v509 = vmul.f32 %v506, %v508
        %v510 = vlaneseq
        %v511 = vshrl.u32 %v510, 7
        %v512 = vsub.s32 1, %v511
        %v513 = vrot.slane %v333, %v512
        %v514 = vmul.f32 %v509, %v513
        %v515 = vlaneseq
        %v516 = vshrl.u32 %v515, 7
        %v517 = vsub.s32 2, %v516
        %v518 = vrot.slane %v333, %v517
        %v519 = vadd.f32 %v514, %v518
        %v520 = vmul.f32 %v519, %v331
        %v521 = vsel %vm342, %v520, 0.0
        %522 = vadd.xlane.f32.xlu0 %v521
        %v523 = vpop.xlane.xlu0 %522
        %v524 = vmul.f32 %v519, %v519
        %v525 = vsel %vm342, %v524, 0.0
        %526 = vadd.xlane.f32.xlu0 %v525
        %v527 = vpop.xlane.xlu0 %526
        %v528 = vmul.f32 %v331, %v331
        %v529 = vsel %vm342, %v528, 0.0
        %530 = vadd.xlane.f32.xlu0 %v529
        %v531 = vpop.xlane.xlu0 %530
        %v532 = vmul.f32 %v527, %v531
        %v533 = vmax.f32 %v532, 1e-16
        %v534 = vrsqrt.pop %v533
        %v535 = vmul.f32 %v523, %v534
        %s536 = sadd.s32 %s30, %s31
        %v537 = vlaneseq
        %v538 = vshrl.u32 %v537, 7
        %s539 = smul.u32 %s536, 8
        %v540 = vstv %s539
        %v541 = vadd.s32 %v538, %v540
        %vm542 = vcmp.lt.s32.totalorder %v541, 16
        %v543 = vsel %vm542, %v535, 0.0
        %v544 = vld [vmem:[#allocation2] sm:$0xff]
        %v545 = vadd.f32 %v544, %v543
        %vm546 = vcmask 7168
        %547 = vst.msk [vmem:[#allocation2] sm:$0xff] %vm546, %v545
        // Predicated region
        $region61: #{tpu_custom_call.1} parent=39 // pred_check
          %p548 = pneg %p325
        $region62: #{tpu_custom_call.1} parent=39 // pred_check_branch
          %550 = sbr.rel (%p548) target = $region64
        $region63: #{tpu_custom_call.1} parent=39 // pred_region
          %v551 = vld [vmem:[#allocation2] sm:$0xff]
          %v552 = vsel %vm546, %v551, 0.0
          %553 = vadd.xlane.f32.xlu0 %v552
          %v554 = vpop.xlane.xlu0 %553
          %v555 = vrot.slane %v554, 4
          %v556 = vadd.f32 %v554, %v555
          %v557 = vrot.slane %v556, 2
          %v558 = vadd.f32 %v556, %v557
          %v559 = vrot.slane %v558, 1
          %v560 = vadd.f32 %v558, %v559
          %s561 = vtos %v560
          %v562 = vstv %s561
          %563 = vst [vmem:[%s322] sm:$0x1] %v562
        $region64: #{tpu_custom_call.1} parent=39 // pred_fallthru
          _
        %s564 = sand.u32 %s165, 1
        %s565 = scalar_lea.sflag [#allocation5], %s564
        %s566 = sand.u32 %s165, 1
        %s567 = scalar_lea.vmem [#allocation11], %s566
        // Predicated region
        $region65: #{tpu_custom_call.1} parent=39 // pred_check
          %p568 = pneg %p175
        $region66: #{tpu_custom_call.1} parent=39 // pred_check_branch
          %570 = sbr.rel (%p568) target = $region68
        $region67: #{tpu_custom_call.1} parent=39 // pred_region
          %s572 = ssub.s32 16, 16
          %573 = vsyncadd %s565, %s572
          %s574 = smul.addr %s30, 16
          %s575 = scalar_lea.hbm %s5, %s574
          %s577 = sshll.u32 %s567, 4
          %s578 = int_to_ptr.vmem [resolvable:$true] %s577
          %580 = dma.vmem_to_hbm [thread:$0]  %s578, 16, %s575, %s565
        $region68: #{tpu_custom_call.1} parent=39 // pred_fallthru
          _
      $region40: #{tpu_custom_call.1} parent=5 // pred_fallthru
        _
      %p581 = scmp.le.s32.totalorder 2, %s21
      // Predicated region
      $region69: #{tpu_custom_call.1} parent=5 // pred_check
        %p582 = pneg %p581
      $region70: #{tpu_custom_call.1} parent=5 // pred_check_branch
        %584 = sbr.rel (%p582) target = $region72
      $region71: #{tpu_custom_call.1} parent=5 // pred_region
        %s585 = ssub.s32 %s21, 2
        // Predicated region
        $region73: #{tpu_custom_call.1} parent=71 // pred_check
          %p586 = pneg %p181
        $region74: #{tpu_custom_call.1} parent=71 // pred_check_branch
          %588 = sbr.rel (%p586) target = $region76
        $region75: #{tpu_custom_call.1} parent=71 // pred_region
          %s589 = sand.u32 %s166, 1
          %s590 = scalar_lea.sflag [#allocation5], %s589
          %s591 = sand.u32 %s166, 1
          %s592 = scalar_lea.vmem [#allocation11], %s591
          %593 = dma.done %s590, 16
        $region76: #{tpu_custom_call.1} parent=71 // pred_fallthru
          _
      $region72: #{tpu_custom_call.1} parent=5 // pred_fallthru
        _
    $region6: #{tpu_custom_call.1} parent=1 // loop_footer
      %s25 = sadd.s32 1, %s21
    $region7: #{tpu_custom_call.1} parent=1 // loop_footer_branch
      %20 = sbr.rel target = $region3
    $region8: #{tpu_custom_call.1} parent=1 // loop_exit
      _
    %594 = vsyncpa [#allocation4], 1
    %s595 = scalar_lea.sflag [#allocation4], 1
    %596 = vsyncpa %s595, 1
    %597 = vsyncpa [#allocation7], 1
    %s598 = scalar_lea.sflag [#allocation7], 1
    %599 = vsyncpa %s598, 1
    %600 = vsyncpa [#allocation10], 1
    %601 = vsyncpa [#allocation5], 1
    %s602 = scalar_lea.sflag [#allocation5], 1
    %603 = vsyncpa %s602, 1

</llo_original>
